<compile_context>
chip_gen: v5e
topology: v5e:2x2
jax: 0.10.0
libtpu: 0.0.40
codegen_flags: <defaults>
</compile_context>

<pallas_src>
import functools

import numpy as np
import jax
import jax.numpy as jnp
from jax.experimental import pallas as pl
from jax.experimental.pallas import tpu as pltpu

_HALF_LOG_2PI = 0.5 * float(np.log(2.0 * np.pi))
# sigma = softplus(0) = log(2), identical for every action dim (fixed by the module).
_SIGMA = float(np.log(2.0))
_LOG_SIGMA = float(np.log(_SIGMA))

_OUT_LANES = 128  # lane-dense fused output slab width


def actor_kernel(state_ref, eps_ref, wb1_ref, wb2_ref, wb3_ref, out_ref, *,
                 a_dim, sigma, log_sigma):
    x = state_ref[...]

    # Each wb_i packs [W_i ; b_i] as (fan_in + 1, fan_out); static row slices are free.
    k1 = wb1_ref.shape[0] - 1
    k2 = wb2_ref.shape[0] - 1
    k3 = wb3_ref.shape[0] - 1

    h1 = jnp.dot(x, wb1_ref[:k1, :], preferred_element_type=jnp.float32) + wb1_ref[k1:k1 + 1, :]
    h1 = jnp.maximum(h1, 0.0)

    h2 = jnp.dot(h1, wb2_ref[:k2, :], preferred_element_type=jnp.float32) + wb2_ref[k2:k2 + 1, :]
    h2 = jnp.maximum(h2, 0.0)

    mu = jnp.tanh(
        jnp.dot(h2, wb3_ref[:k3, :], preferred_element_type=jnp.float32) + wb3_ref[k3:k3 + 1, :])

    # Reparameterized sample: action = mu + sigma * eps, eps ~ N(0, 1).
    eps = eps_ref[...]
    action = mu + sigma * eps

    # log_prob(action).sum(-1): action - mu == sigma*eps exactly, so
    #   logp = -0.5 * sum(eps^2) - A * (log(sigma) + 0.5*log(2*pi))
    logp = (-0.5 * jnp.sum(eps * eps, axis=-1, keepdims=True)
            - a_dim * (log_sigma + _HALF_LOG_2PI))                      # (tb, 1)

    # Single lane-dense output slab: [action | log_prob | zero pad] -> unmasked store.
    pieces = [action, logp]
    pad = out_ref.shape[1] - (a_dim + 1)
    if pad > 0:
        pieces.append(jnp.zeros((action.shape[0], pad), jnp.float32))
    out_ref[...] = jnp.concatenate(pieces, axis=-1)


def _round_up(x, m):
    return ((x + m - 1) // m) * m


def prepare_params(w1, b1, w2, b2, w3, b3):
    """Pack (W|b) per layer into one buffer each -> 3 parameter DMAs instead of 6."""
    return (jnp.concatenate([w1, b1], axis=0),
            jnp.concatenate([w2, b2], axis=0),
            jnp.concatenate([w3, b3], axis=0))


def actor_net_forward(state, eps, packed_params, *,
                      sigma=_SIGMA, log_sigma=_LOG_SIGMA, block_b=256):
    """ActorNet forward. Returns (action (B,A), log_prob (B,1), entropy (B,1))."""
    wb1, wb2, wb3 = packed_params
    B, S = state.shape
    A = wb3.shape[1]
    assert A + 1 <= _OUT_LANES

    # Batch tile: multiple of 8 (f32 sublane), capped at block_b; pad ragged batches.
    tb = min(block_b, _round_up(B, 8))
    b_pad = _round_up(B, tb)
    if b_pad != B:
        state = jnp.pad(state, ((0, b_pad - B), (0, 0)))
        eps = jnp.pad(eps, ((0, b_pad - B), (0, 0)))

    kernel = functools.partial(actor_kernel, a_dim=A, sigma=sigma, log_sigma=log_sigma)

    fused = pl.pallas_call(
        kernel,
        out_shape=jax.ShapeDtypeStruct((b_pad, _OUT_LANES), jnp.float32),
        grid_spec=pltpu.PrefetchScalarGridSpec(
            num_scalar_prefetch=0,
            grid=(b_pad // tb,),
            in_specs=[
                pl.BlockSpec((tb, S), lambda i: (i, 0)),
                pl.BlockSpec((tb, A), lambda i: (i, 0)),
                # Constant block index -> weights DMA'd once, VMEM-resident across tiles.
                pl.BlockSpec(wb1.shape, lambda i: (0, 0)),
                pl.BlockSpec(wb2.shape, lambda i: (0, 0)),
                pl.BlockSpec(wb3.shape, lambda i: (0, 0)),
            ],
            out_specs=pl.BlockSpec((tb, _OUT_LANES), lambda i: (i, 0)),
        ),
        compiler_params=pltpu.CompilerParams(dimension_semantics=("parallel",)),
    )(state, eps, wb1, wb2, wb3)

    action = fused[:B, :A]
    log_prob = fused[:B, A:A + 1]
    # Entropy of N(mu, sigma) with constant sigma is input-independent:
    #   A * (0.5 + 0.5*log(2*pi) + log(sigma)) — computed outside the kernel.
    entropy = jnp.full((B, 1), A * (0.5 + _HALF_LOG_2PI + log_sigma), dtype=jnp.float32)
    return action, log_prob, entropy


def init_params(key, state_size, action_size, fc1_units=64, fc2_units=64):
    """Deterministic init mimicking nn.Linear's U(-1/sqrt(fan_in), 1/sqrt(fan_in))."""
    def linear(k, fan_in, fan_out):
        kw, kb = jax.random.split(k)
        bound = 1.0 / np.sqrt(fan_in)
        w = jax.random.uniform(kw, (fan_in, fan_out), jnp.float32, -bound, bound)
        b = jax.random.uniform(kb, (1, fan_out), jnp.float32, -bound, bound)
        return w, b

    k1, k2, k3 = jax.random.split(key, 3)
    w1, b1 = linear(k1, state_size, fc1_units)
    w2, b2 = linear(k2, fc1_units, fc2_units)
    w3, b3 = linear(k3, fc2_units, action_size)
    return (w1, b1, w2, b2, w3, b3)


def _reference(state, eps, raw_params):
    w1, b1, w2, b2, w3, b3 = raw_params
    sigma = _SIGMA
    h1 = jnp.maximum(state @ w1 + b1, 0.0)
    h2 = jnp.maximum(h1 @ w2 + b2, 0.0)
    mu = jnp.tanh(h2 @ w3 + b3)
    act = mu + sigma * eps
    logp = jnp.sum(-((act - mu) ** 2) / (2.0 * sigma ** 2)
                   - np.log(sigma) - _HALF_LOG_2PI, axis=-1, keepdims=True)
    ent = jnp.sum(jnp.broadcast_to(0.5 + _HALF_LOG_2PI + np.log(sigma), mu.shape),
                  axis=-1, keepdims=True)
    return act, logp, ent


if __name__ == "__main__":
    STATE_SIZE = 16
    ACTION_SIZE = 4
    BATCH = 2

    root = jax.random.PRNGKey(0)
    k_params, k_state, k_eps, k_state2, k_eps2 = jax.random.split(root, 5)

    raw_params = init_params(k_params, STATE_SIZE, ACTION_SIZE)
    packed_params = prepare_params(*raw_params)

    # Small per-step acting case (B=2, as in the PyTorch module's typical use).
    state = jax.random.normal(k_state, (BATCH, STATE_SIZE), dtype=jnp.float32)
    # Noise for dist.sample() drawn in plain JAX (glue); the reparameterized
    # sample mu + sigma*eps is computed inside the kernel.
    eps = jax.random.normal(k_eps, (BATCH, ACTION_SIZE), dtype=jnp.float32)
    out = actor_net_forward(state, eps, packed_params)
    jax.block_until_ready(out)
    for got, want in zip(out, _reference(state, eps, raw_params)):
        np.testing.assert_allclose(np.asarray(got), np.asarray(want), rtol=1e-5, atol=1e-5)

    # Larger ragged batch exercising the batch grid + padding + resident weights.
    B2 = 300
    state2 = jax.random.normal(k_state2, (B2, STATE_SIZE), dtype=jnp.float32)
    eps2 = jax.random.normal(k_eps2, (B2, ACTION_SIZE), dtype=jnp.float32)
    out2 = actor_net_forward(state2, eps2, packed_params)
    jax.block_until_ready(out2)
    for got, want in zip(out2, _reference(state2, eps2, raw_params)):
        np.testing.assert_allclose(np.asarray(got), np.asarray(want), rtol=1e-5, atol=1e-5)

    # TODO(synk): PyTorch returns action.squeeze(0).cpu().detach().numpy(); the
    # host-side numpy conversion / squeeze is glue outside the kernel.
    print("KERNEL_OK")
</pallas_src>

<mosaic_0001>
module attributes {stable_mosaic.version = 11 : i64} {
  func.func @actor_kernel(%arg0: i32, %arg1: memref<8x16xf32, #tpu.memory_space<vmem>>, %arg2: memref<8x4xf32, #tpu.memory_space<vmem>>, %arg3: memref<17x64xf32, #tpu.memory_space<vmem>>, %arg4: memref<65x64xf32, #tpu.memory_space<vmem>>, %arg5: memref<65x4xf32, #tpu.memory_space<vmem>>, %arg6: memref<8x128xf32, #tpu.memory_space<vmem>>) attributes {dimension_semantics = [#tpu.dimension_semantics<parallel>], iteration_bounds = array<i64: 1>, scalar_prefetch = 0 : i64, scratch_operands = 0 : i64, tpu.core_type = #tpu.core_type<tc>, window_params = [{transform_indices = @transform_0, window_bounds = array<i64: 8, 16>}, {transform_indices = @transform_1, window_bounds = array<i64: 8, 4>}, {pipeline_mode = #tpu.pipeline_mode<synchronous>, transform_indices = @transform_2, window_bounds = array<i64: 17, 64>}, {pipeline_mode = #tpu.pipeline_mode<synchronous>, transform_indices = @transform_3, window_bounds = array<i64: 65, 64>}, {pipeline_mode = #tpu.pipeline_mode<synchronous>, transform_indices = @transform_4, window_bounds = array<i64: 65, 4>}, {transform_indices = @transform_5, window_bounds = array<i64: 8, 128>}]} {
    %c0 = arith.constant 0 : index
    %c0_0 = arith.constant 0 : index
    %0 = vector.load %arg1[%c0, %c0_0] : memref<8x16xf32, #tpu.memory_space<vmem>>, vector<8x16xf32>
    %c0_1 = arith.constant 0 : index
    %c0_2 = arith.constant 0 : index
    %1 = vector.load %arg3[%c0_1, %c0_2] : memref<17x64xf32, #tpu.memory_space<vmem>>, vector<16x64xf32>
    %cst = arith.constant dense<0.000000e+00> : vector<8x64xf32>
    %2 = tpu.matmul %0, %1, %cst {dimension_numbers = #tpu.dot_dimension_numbers<[1], [0], [0], [1], [0, 0, 1, 1], [], []>} : vector<8x16xf32>, vector<16x64xf32>, vector<8x64xf32> -> vector<8x64xf32>
    %c16 = arith.constant 16 : index
    %c0_3 = arith.constant 0 : index
    %3 = vector.load %arg3[%c16, %c0_3] : memref<17x64xf32, #tpu.memory_space<vmem>>, vector<1x64xf32>
    %4 = vector.broadcast %3 : vector<1x64xf32> to vector<8x64xf32>
    %5 = arith.addf %2, %4 : vector<8x64xf32>
    %cst_4 = arith.constant 0.000000e+00 : f32
    %6 = vector.broadcast %cst_4 : f32 to vector<8x64xf32>
    %7 = arith.maximumf %5, %6 : vector<8x64xf32>
    %c0_5 = arith.constant 0 : index
    %c0_6 = arith.constant 0 : index
    %8 = vector.load %arg4[%c0_5, %c0_6] : memref<65x64xf32, #tpu.memory_space<vmem>>, vector<64x64xf32>
    %cst_7 = arith.constant dense<0.000000e+00> : vector<8x64xf32>
    %9 = tpu.matmul %7, %8, %cst_7 {dimension_numbers = #tpu.dot_dimension_numbers<[1], [0], [0], [1], [0, 0, 1, 1], [], []>} : vector<8x64xf32>, vector<64x64xf32>, vector<8x64xf32> -> vector<8x64xf32>
    %c64 = arith.constant 64 : index
    %c0_8 = arith.constant 0 : index
    %10 = vector.load %arg4[%c64, %c0_8] : memref<65x64xf32, #tpu.memory_space<vmem>>, vector<1x64xf32>
    %11 = vector.broadcast %10 : vector<1x64xf32> to vector<8x64xf32>
    %12 = arith.addf %9, %11 : vector<8x64xf32>
    %cst_9 = arith.constant 0.000000e+00 : f32
    %13 = vector.broadcast %cst_9 : f32 to vector<8x64xf32>
    %14 = arith.maximumf %12, %13 : vector<8x64xf32>
    %c0_10 = arith.constant 0 : index
    %c0_11 = arith.constant 0 : index
    %15 = vector.load %arg5[%c0_10, %c0_11] : memref<65x4xf32, #tpu.memory_space<vmem>>, vector<64x4xf32>
    %cst_12 = arith.constant dense<0.000000e+00> : vector<8x4xf32>
    %16 = tpu.matmul %14, %15, %cst_12 {dimension_numbers = #tpu.dot_dimension_numbers<[1], [0], [0], [1], [0, 0, 1, 1], [], []>} : vector<8x64xf32>, vector<64x4xf32>, vector<8x4xf32> -> vector<8x4xf32>
    %c64_13 = arith.constant 64 : index
    %c0_14 = arith.constant 0 : index
    %17 = vector.load %arg5[%c64_13, %c0_14] : memref<65x4xf32, #tpu.memory_space<vmem>>, vector<1x4xf32>
    %18 = vector.broadcast %17 : vector<1x4xf32> to vector<8x4xf32>
    %19 = arith.addf %16, %18 : vector<8x4xf32>
    %20 = math.tanh %19 : vector<8x4xf32>
    %c0_15 = arith.constant 0 : index
    %c0_16 = arith.constant 0 : index
    %21 = vector.load %arg2[%c0_15, %c0_16] : memref<8x4xf32, #tpu.memory_space<vmem>>, vector<8x4xf32>
    %cst_17 = arith.constant 0.693147182 : f32
    %22 = vector.broadcast %cst_17 : f32 to vector<8x4xf32>
    %23 = arith.mulf %22, %21 : vector<8x4xf32>
    %24 = arith.addf %20, %23 : vector<8x4xf32>
    %25 = arith.mulf %21, %21 : vector<8x4xf32>
    %cst_18 = arith.constant dense<0.000000e+00> : vector<8xf32>
    %26 = vector.multi_reduction <add>, %25, %cst_18 [1] : vector<8x4xf32> to vector<8xf32>
    %27 = vector.shape_cast %26 : vector<8xf32> to vector<8x1xf32>
    %cst_19 = arith.constant -5.000000e-01 : f32
    %28 = vector.broadcast %cst_19 : f32 to vector<8x1xf32>
    %29 = arith.mulf %28, %27 : vector<8x1xf32>
    %cst_20 = arith.constant 2.20970249 : f32
    %30 = vector.broadcast %cst_20 : f32 to vector<8x1xf32>
    %31 = arith.subf %29, %30 : vector<8x1xf32>
    %cst_21 = arith.constant 0.000000e+00 : f32
    %32 = vector.broadcast %cst_21 : f32 to vector<8x123xf32>
    %33 = tpu.concatenate %24, %31, %32 in 1 : vector<8x4xf32>, vector<8x1xf32>, vector<8x123xf32> -> vector<8x128xf32>
    %c0_22 = arith.constant 0 : index
    %c0_23 = arith.constant 0 : index
    %34 = vector.load %arg6[%c0_22, %c0_23] : memref<8x128xf32, #tpu.memory_space<vmem>>, vector<8x128xf32>
    tpu.vector_store %arg6[%c0_22, %c0_23], %33 {strides = array<i32>} : memref<8x128xf32, #tpu.memory_space<vmem>>, vector<8x128xf32>,
    return
  }
  func.func @transform_0(%arg0: i32) -> (i32, i32) {
    %c0_i32 = arith.constant 0 : i32
    %c0_i32_0 = arith.constant 0 : i32
    return %arg0, %c0_i32 : i32, i32
  }
  func.func @transform_1(%arg0: i32) -> (i32, i32) {
    %c0_i32 = arith.constant 0 : i32
    %c0_i32_0 = arith.constant 0 : i32
    return %arg0, %c0_i32 : i32, i32
  }
  func.func @transform_2(%arg0: i32) -> (i32, i32) {
    %c0_i32 = arith.constant 0 : i32
    %c0_i32_0 = arith.constant 0 : i32
    %c0_i32_1 = arith.constant 0 : i32
    return %c0_i32, %c0_i32_0 : i32, i32
  }
  func.func @transform_3(%arg0: i32) -> (i32, i32) {
    %c0_i32 = arith.constant 0 : i32
    %c0_i32_0 = arith.constant 0 : i32
    %c0_i32_1 = arith.constant 0 : i32
    return %c0_i32, %c0_i32_0 : i32, i32
  }
  func.func @transform_4(%arg0: i32) -> (i32, i32) {
    %c0_i32 = arith.constant 0 : i32
    %c0_i32_0 = arith.constant 0 : i32
    %c0_i32_1 = arith.constant 0 : i32
    return %c0_i32, %c0_i32_0 : i32, i32
  }
  func.func @transform_5(%arg0: i32) -> (i32, i32) {
    %c0_i32 = arith.constant 0 : i32
    %c0_i32_0 = arith.constant 0 : i32
    return %arg0, %c0_i32 : i32, i32
  }
}

</mosaic_0001>

<llo_original>
// kernel: tpu_custom_call.1
$region0: #{tpu_custom_call.1}
  #allocation0 [shape = 'u32[]', space=smem, size = 0x4, offset = 0x4, fixed_abs, tag = 'smem constant byte address 0x4 - core index']
  #allocation1 [shape = 'u32[72,128]{1,0:T(1,128)}', space=vmem, size = 0x9000, scoped, tag = 'internal scratch']
  %s0 = inlined_call_operand.vmem [shape: f32[8,16], index: 0, kind: input, shape index: {}]
  %s1 = inlined_call_operand.vmem [shape: f32[8,4], index: 1, kind: input, shape index: {}]
  %s2 = inlined_call_operand.vmem [shape: f32[17,64], index: 2, kind: input, shape index: {}]
  %s3 = inlined_call_operand.vmem [shape: f32[65,64], index: 3, kind: input, shape index: {}]
  %s4 = inlined_call_operand.vmem [shape: f32[65,4], index: 4, kind: input, shape index: {}]
  %s5 = inlined_call_operand.hbm [shape: f32[8,128], index: 5, kind: output, shape index: {}]
  %s6 = sld [smem:[#allocation0]]
  $region30: #{tpu_custom_call.1} parent=0
    _
  %s8 = ssub.s32 1, %s6
  %s9 = scalar_select 0, %s8, %s6
  $region1: #{tpu_custom_call.1} parent=0
    #allocation2 [shape = 'u8[4096]{0}', space=vmem, size = 0x1000, scoped, tag = 'output window, operand 0, single buffered']
    #allocation3 [shape = 's32[1]{0}', space=sflag, size = 0x4, scoped, tag = 'scoped memory for tpu_custom_call.1']
    %10 = vsyncpa [#allocation3], 0
    // Predicated region
    $region2: #{tpu_custom_call.1} parent=1 // pred_check
      _
    $region3: #{tpu_custom_call.1} parent=1 // pred_check_branch
      %12 = sbr.rel (0) target = $region5
    $region4: #{tpu_custom_call.1} parent=1 // pred_region
      _
    $region5: #{tpu_custom_call.1} parent=1 // pred_fallthru
      _
    // Predicated region
    $region6: #{tpu_custom_call.1} parent=1 // pred_check
      _
    $region7: #{tpu_custom_call.1} parent=1 // pred_check_branch
      %14 = sbr.rel (0) target = $region9
    $region8: #{tpu_custom_call.1} parent=1 // pred_region
      _
    $region9: #{tpu_custom_call.1} parent=1 // pred_fallthru
      _
    // Predicated region
    $region10: #{tpu_custom_call.1} parent=1 // pred_check
      _
    $region11: #{tpu_custom_call.1} parent=1 // pred_check_branch
      %16 = sbr.rel (0) target = $region13
    $region12: #{tpu_custom_call.1} parent=1 // pred_region
      _
    $region13: #{tpu_custom_call.1} parent=1 // pred_fallthru
      _
    // Predicated region
    $region14: #{tpu_custom_call.1} parent=1 // pred_check
      _
    $region15: #{tpu_custom_call.1} parent=1 // pred_check_branch
      %18 = sbr.rel (0) target = $region17
    $region16: #{tpu_custom_call.1} parent=1 // pred_region
      _
    $region17: #{tpu_custom_call.1} parent=1 // pred_fallthru
      _
    // Predicated region
    $region18: #{tpu_custom_call.1} parent=1 // pred_check
      _
    $region19: #{tpu_custom_call.1} parent=1 // pred_check_branch
      %20 = sbr.rel (0) target = $region21
    $region20: #{tpu_custom_call.1} parent=1 // pred_region
      _
    $region21: #{tpu_custom_call.1} parent=1 // pred_fallthru
      _
    %v21 = vld [vmem:[%s0] sm:$0xff]
    %v22 = vld [vmem:[%s2] sm:$0xff]
    %v23 = vld [vmem:[%s2 + $0x8] sm:$0xff]
    %v24 = vld [vmem:[%s2 + $0x10] sm:$0x1]
    %v25 = vperm.slane %v24, 0
    %vm26 = vcmask 130048
    %v28 = vsel %vm26, %v21, 0
    %30 = vmatpush.msra.mxu0 0.0
    %31 = vmatpush.msra.mxu0 0.0
    %32 = vmatpush.msra.mxu0 0.0
    %33 = vmatpush.msra.mxu0 0.0
    %34 = vmatpush.msra.mxu0 0.0
    %35 = vmatpush.msra.mxu0 0.0
    %36 = vmatpush.msra.mxu0 0.0
    %37 = vmatpush.msra.mxu0 0.0
    %38 = vmatpush.msra.mxu0 0.0
    %39 = vmatpush.msra.mxu0 0.0
    %40 = vmatpush.msra.mxu0 0.0
    %41 = vmatpush.msra.mxu0 0.0
    %42 = vmatpush.msra.mxu0 0.0
    %43 = vmatpush.msra.mxu0 0.0
    %44 = vmatpush.msra.mxu0 %v23
    %45 = vmatpush.msra.mxu0 %v22
    %46 = vmatmul.f32.gmra.mxu0 %v28
    %v47 = vpop.f32.mrf.mxu0
    %v48 = vadd.f32 %v25, %v47
    %49 = vdwg.mxu0
    %v50 = vmax.f32 %v48, 0.0
    %v51 = vld [vmem:[%s3] sm:$0xff]
    %v52 = vld [vmem:[%s3 + $0x8] sm:$0xff]
    %v53 = vld [vmem:[%s3 + $0x10] sm:$0xff]
    %v54 = vld [vmem:[%s3 + $0x18] sm:$0xff]
    %v55 = vld [vmem:[%s3 + $0x20] sm:$0xff]
    %v56 = vld [vmem:[%s3 + $0x28] sm:$0xff]
    %v57 = vld [vmem:[%s3 + $0x30] sm:$0xff]
    %v58 = vld [vmem:[%s3 + $0x38] sm:$0xff]
    %v59 = vld [vmem:[%s3 + $0x40] sm:$0x1]
    %v60 = vperm.slane %v59, 0
    %vm61 = vcmask 523264
    %v63 = vsel %vm61, %v50, 0
    %65 = vmatpush.msra.mxu0 0.0
    %66 = vmatpush.msra.mxu0 0.0
    %67 = vmatpush.msra.mxu0 0.0
    %68 = vmatpush.msra.mxu0 0.0
    %69 = vmatpush.msra.mxu0 0.0
    %70 = vmatpush.msra.mxu0 0.0
    %71 = vmatpush.msra.mxu0 0.0
    %72 = vmatpush.msra.mxu0 0.0
    %73 = vmatpush.msra.mxu0 %v58
    %74 = vmatpush.msra.mxu0 %v57
    %75 = vmatpush.msra.mxu0 %v56
    %76 = vmatpush.msra.mxu0 %v55
    %77 = vmatpush.msra.mxu0 %v54
    %78 = vmatpush.msra.mxu0 %v53
    %79 = vmatpush.msra.mxu0 %v52
    %80 = vmatpush.msra.mxu0 %v51
    %81 = vmatmul.f32.gmra.mxu0 %v63
    %v82 = vpop.f32.mrf.mxu0
    %v83 = vadd.f32 %v60, %v82
    %84 = vdwg.mxu0
    %v85 = vmax.f32 %v83, 0.0
    %v86 = vld [vmem:[%s4] sm:$0xff]
    %v87 = vld [vmem:[%s4 + $0x8] sm:$0xff]
    %v88 = vld [vmem:[%s4 + $0x10] sm:$0xff]
    %v89 = vld [vmem:[%s4 + $0x18] sm:$0xff]
    %v90 = vld [vmem:[%s4 + $0x20] sm:$0xff]
    %v91 = vld [vmem:[%s4 + $0x28] sm:$0xff]
    %v92 = vld [vmem:[%s4 + $0x30] sm:$0xff]
    %v93 = vld [vmem:[%s4 + $0x38] sm:$0xff]
    %v94 = vld [vmem:[%s4 + $0x40] sm:$0x1]
    %v95 = vperm.slane %v94, 0
    %v97 = vsel %vm61, %v85, 0
    %99 = vmatpush.msra.mxu0 0.0
    %100 = vmatpush.msra.mxu0 0.0
    %101 = vmatpush.msra.mxu0 0.0
    %102 = vmatpush.msra.mxu0 0.0
    %103 = vmatpush.msra.mxu0 0.0
    %104 = vmatpush.msra.mxu0 0.0
    %105 = vmatpush.msra.mxu0 0.0
    %106 = vmatpush.msra.mxu0 0.0
    %107 = vmatpush.msra.mxu0 %v93
    %108 = vmatpush.msra.mxu0 %v92
    %109 = vmatpush.msra.mxu0 %v91
    %110 = vmatpush.msra.mxu0 %v90
    %111 = vmatpush.msra.mxu0 %v89
    %112 = vmatpush.msra.mxu0 %v88
    %113 = vmatpush.msra.mxu0 %v87
    %114 = vmatpush.msra.mxu0 %v86
    %115 = vmatmul.f32.gmra.mxu0 %v97
    %v116 = vpop.f32.mrf.mxu0
    %v117 = vadd.f32 %v95, %v116
    %118 = vdwg.mxu0
    %v119 = vtanh.pop %v117
    %v120 = vld [vmem:[%s1] sm:$0xff]
    %v121 = vmul.f32 %v120, 0.6931472
    %v122 = vadd.f32 %v119, %v121
    %v123 = vmul.f32 %v120, %v120
    %vm124 = vcmask 31744
    %v125 = vsel %vm124, %v123, 0.0
    %126 = vadd.xlane.f32.xlu0 %v125
    %v127 = vpop.xlane.xlu0 %126
    %v128 = vmul.f32 %v127, -0.5
    %v129 = vsub.f32 %v128, 2.2097025
    %v130 = vsel %vm124, %v122, %v129
    %vm131 = vcmask 39936
    %v132 = vsel %vm131, %v130, 0.0
    %133 = vst [vmem:[#allocation2] sm:$0xff] %v132
    // Predicated region
    $region22: #{tpu_custom_call.1} parent=1 // pred_check
      _
    $region23: #{tpu_custom_call.1} parent=1 // pred_check_branch
      %135 = sbr.rel (0) target = $region25
    $region24: #{tpu_custom_call.1} parent=1 // pred_region
      %137 = vsyncadd [#allocation3], 0
      %s139 = sshll.u32 [#allocation2], 4
      %s140 = int_to_ptr.vmem [resolvable:$true] %s139
      %s141 = sshll.u32 %s5, 4
      %s142 = int_to_ptr.hbm [resolvable:$true] %s141
      %144 = dma.vmem_to_hbm [thread:$0]  %s140, 128, %s142, [#allocation3]
    $region25: #{tpu_custom_call.1} parent=1 // pred_fallthru
      _
    // Predicated region
    $region26: #{tpu_custom_call.1} parent=1 // pred_check
      _
    $region27: #{tpu_custom_call.1} parent=1 // pred_check_branch
      %146 = sbr.rel (0) target = $region29
    $region28: #{tpu_custom_call.1} parent=1 // pred_region
      %148 = dma.done [#allocation3], 128
    $region29: #{tpu_custom_call.1} parent=1 // pred_fallthru
      _
    %149 = vsyncpa [#allocation3], 1

</llo_original>
